<compile_context>
chip_gen: v7x
topology: tpu7x:2x2x1
jax: 0.10.0
libtpu: 0.0.40
codegen_flags: <defaults>
</compile_context>

<pallas_src>
import functools

import jax
import jax.numpy as jnp
import numpy as np
from jax import lax
from jax.experimental import pallas as pl
from jax.experimental.pallas import tpu as pltpu


def _round_up(v, m):
    return (v + m - 1) // m * m


def _s2v_kernel(dst_ref, mu_ref, ew_ref, w4_ref, wbig_ref, o_ref, acc_ref,
                *, in_dim, out_dim):
    """Grid = (node blocks i [parallel], E blocks j [arbitrary])."""
    j = pl.program_id(1)
    n_tile, out_p = acc_ref.shape
    e_tile = dst_ref.shape[1]

    @pl.when(j == 0)
    def _():
        acc_ref[...] = jnp.zeros_like(acc_ref)

    # One-hot scatter tile S[n, e] = (dst[e] == global node id n) for this block.
    n0 = pl.program_id(0) * n_tile
    node_ids = n0 + lax.broadcasted_iota(jnp.int32, (n_tile, e_tile), 0)
    S = (node_ids == dst_ref[...]).astype(jnp.float32)            # [n_tile, e_tile]

    # relu(lin4(edge_w)): contraction depth 1 -> VPU broadcast outer product.
    ew = jnp.maximum(ew_ref[...] * w4_ref[...], 0.0)              # [e_tile, out_p]
    # Spare padded lane `out_dim` carries 1.0 so the same MXU pass also produces
    # per-node degree in acc[:, out_dim] (padded edges have dst == -1 -> no hit).
    deg_lane = lax.broadcasted_iota(jnp.int32, ew.shape, 1) == out_dim
    ew = jnp.where(deg_lane, 1.0, ew)

    # scatter_add of this E block (MXU), accumulated across E blocks.
    acc_ref[...] += jnp.dot(S, ew, preferred_element_type=jnp.float32)

    @pl.when(j == pl.num_programs(1) - 1)
    def _():
        deg = acc_ref[:, out_dim:out_dim + 1]                     # [n_tile, 1]
        # mu path: scatter_add(gather(mu, dst), dst) == deg * mu (both keyed on dst).
        # mu_ref carries x in spare lane `in_dim`, which must NOT be scaled by deg so
        # lin1(x) rides along row `in_dim` of the fused weight for free.
        x_lane = lax.broadcasted_iota(jnp.int32, mu_ref.shape, 1) == in_dim
        mu_scat = mu_ref[...] * jnp.where(x_lane, 1.0, deg)       # [n_tile, in_p]
        # Single fused K = in_p + out_p matmul:
        #   [deg*mu | x | 0] @ [w2.T ; w1.T ; 0]  +  [ew_scat | deg | 0] @ [w3.T ; 0]
        big = jnp.concatenate([mu_scat, acc_ref[...]], axis=1)    # [n_tile, in_p+out_p]
        o_ref[...] = jnp.maximum(
            jnp.dot(big, wbig_ref[...], preferred_element_type=jnp.float32), 0.0)


def prepare_weights(params, *, in_dim, out_dim):
    """One-time weight padding / fusion (hoisted out of the per-forward path).

    PyTorch nn.Linear(in, out, bias=False) weight shape is [out, in].
    Returns (w4_row [1, out_p], w_big [in_p + out_p, out_p]).
    """
    in_p = _round_up(in_dim + 1, 128)    # +1 spare lane carries x (lin1 path)
    out_p = _round_up(out_dim + 1, 128)  # +1 spare lane carries degree
    w4_row = jnp.zeros((1, out_p), jnp.float32).at[0, :out_dim].set(params["w4"][:, 0])
    w_big = jnp.zeros((in_p + out_p, out_p), jnp.float32)
    w_big = w_big.at[:in_dim, :out_dim].set(params["w2"].T)       # mu path    (lin2)
    w_big = w_big.at[in_dim, :out_dim].set(params["w1"][:, 0])    # x path     (lin1)
    w_big = w_big.at[in_p:in_p + out_dim, :out_dim].set(params["w3"].T)  # edge (lin3)
    return w4_row, w_big


def s2v_forward(mu, x, edge_index, edge_w, w4_row, w_big, *,
                out_dim, n_tile=256, e_tile=2048):
    N, in_dim = mu.shape
    E = edge_index.shape[1]
    in_p = _round_up(in_dim + 1, 128)
    out_p = w4_row.shape[1]

    # Tile sizes: cap per-step footprint (S tile <= 256x2048 f32 = 2 MiB) and pad the
    # array extents to whole tiles so every block is full (lane-dense, no masking).
    n_tile = min(n_tile, _round_up(N, 8))
    e_tile = min(e_tile, _round_up(E, 128))
    n_p = _round_up(N, n_tile)
    e_p = _round_up(E, e_tile)

    # Node features; x folded into spare lane `in_dim`; padded rows/lanes are zero.
    mu_aug = jnp.zeros((n_p, in_p), jnp.float32)
    mu_aug = mu_aug.at[:N, :in_dim].set(mu)
    mu_aug = mu_aug.at[:N, in_dim].set(x[:, 0])

    ew_p = jnp.zeros((e_p, 1), jnp.float32).at[:E, :].set(edge_w)
    # Padded edges carry dst = -1 so they match no node id.
    dst_p = jnp.full((1, e_p), -1, jnp.int32).at[0, :E].set(
        edge_index[1, :].astype(jnp.int32))

    grid = (n_p // n_tile, e_p // e_tile)
    kernel = functools.partial(_s2v_kernel, in_dim=in_dim, out_dim=out_dim)

    out_padded = pl.pallas_call(
        kernel,
        out_shape=jax.ShapeDtypeStruct((n_p, out_p), jnp.float32),
        grid_spec=pltpu.PrefetchScalarGridSpec(
            num_scalar_prefetch=0,
            grid=grid,
            in_specs=[
                pl.BlockSpec((1, e_tile), lambda i, j: (0, j)),             # dst
                pl.BlockSpec((n_tile, in_p), lambda i, j: (i, 0)),          # mu (+x lane)
                pl.BlockSpec((e_tile, 1), lambda i, j: (j, 0)),             # edge_w
                pl.BlockSpec((1, out_p), lambda i, j: (0, 0)),              # w4 row
                pl.BlockSpec((in_p + out_p, out_p), lambda i, j: (0, 0)),   # fused weight
            ],
            out_specs=pl.BlockSpec((n_tile, out_p), lambda i, j: (i, 0)),
            scratch_shapes=[pltpu.VMEM((n_tile, out_p), jnp.float32)],
        ),
        compiler_params=pltpu.CompilerParams(
            dimension_semantics=("parallel", "arbitrary")),
    )(dst_p, mu_aug, ew_p, w4_row, w_big)

    return out_padded[:N, :out_dim]


def s2v_reference(mu, x, edge_index, edge_w, params):
    """Pure-JAX reference mirroring the PyTorch forward."""
    N = mu.shape[0]
    idx = edge_index[1]
    x1 = x @ params["w1"].T
    mu_j = mu[idx, :]
    mu_aggr = jax.ops.segment_sum(mu_j, idx, num_segments=N) @ params["w2"].T
    ew = jax.nn.relu(edge_w @ params["w4"].T)
    ew_aggr = jax.ops.segment_sum(ew, idx, num_segments=N) @ params["w3"].T
    return jax.nn.relu(x1 + mu_aggr + ew_aggr)


def _make_inputs(key, N, E, in_dim):
    k_mu, k_x, k_src, k_dst, k_ew = jax.random.split(key, 5)
    mu = jax.random.normal(k_mu, (N, in_dim), dtype=jnp.float32)
    x = jax.random.normal(k_x, (N, 1), dtype=jnp.float32)
    dst_idx = jnp.concatenate(
        [jnp.arange(min(N, E), dtype=jnp.int32),
         jax.random.randint(k_dst, (max(E - N, 0),), 0, N, dtype=jnp.int32)])[:E]
    src_idx = jax.random.randint(k_src, (E,), 0, N, dtype=jnp.int32)
    edge_index = jnp.stack([src_idx, dst_idx], axis=0)            # [2, E]
    edge_w = jax.random.normal(k_ew, (E, 1), dtype=jnp.float32)
    return mu, x, edge_index, edge_w


if __name__ == "__main__":
    in_dim, out_dim = 8, 32
    key = jax.random.PRNGKey(0)
    k_in, k1, k2, k3, k4, k_in2 = jax.random.split(key, 6)

    # PyTorch nn.Linear(in, out, bias=False) weight shape is [out, in].
    params = {
        "w1": 0.1 * jax.random.normal(k1, (out_dim, 1), dtype=jnp.float32),
        "w2": 0.1 * jax.random.normal(k2, (out_dim, in_dim), dtype=jnp.float32),
        "w3": 0.1 * jax.random.normal(k3, (out_dim, out_dim), dtype=jnp.float32),
        "w4": 0.1 * jax.random.normal(k4, (out_dim, 1), dtype=jnp.float32),
    }
    # One-time weight padding / fusion, hoisted out of the jitted forward.
    w4_row, w_big = prepare_weights(params, in_dim=in_dim, out_dim=out_dim)

    fwd = jax.jit(functools.partial(s2v_forward, out_dim=out_dim))

    # Small single-block case (N=16 nodes, E=24 edges -> grid (1, 1)).
    mu, x, edge_index, edge_w = _make_inputs(k_in, N=16, E=24, in_dim=in_dim)
    out = jax.block_until_ready(fwd(mu, x, edge_index, edge_w, w4_row, w_big))
    ref = s2v_reference(mu, x, edge_index, edge_w, params)
    np.testing.assert_allclose(np.asarray(out), np.asarray(ref), rtol=1e-4, atol=1e-4)

    # Multi-block case exercising the (parallel node, arbitrary E) grid and the
    # pl.when init / accumulate / finalize path: grid (5, 3).
    fwd_tiled = jax.jit(functools.partial(
        s2v_forward, out_dim=out_dim, n_tile=8, e_tile=128))
    mu2, x2, ei2, ew2 = _make_inputs(k_in2, N=40, E=300, in_dim=in_dim)
    out2 = jax.block_until_ready(fwd_tiled(mu2, x2, ei2, ew2, w4_row, w_big))
    ref2 = s2v_reference(mu2, x2, ei2, ew2, params)
    np.testing.assert_allclose(np.asarray(out2), np.asarray(ref2), rtol=1e-4, atol=1e-4)

    print("KERNEL_OK")
</pallas_src>

<mosaic_0001>
module attributes {stable_mosaic.version = 11 : i64} {
  func.func @_s2v_kernel(%arg0: i32, %arg1: i32, %arg2: memref<1x128xi32, #tpu.memory_space<vmem>>, %arg3: memref<16x128xf32, #tpu.memory_space<vmem>>, %arg4: memref<128x1xf32, #tpu.memory_space<vmem>>, %arg5: memref<1x128xf32, #tpu.memory_space<vmem>>, %arg6: memref<256x128xf32, #tpu.memory_space<vmem>>, %arg7: memref<16x128xf32, #tpu.memory_space<vmem>>, %arg8: memref<16x128xf32, #tpu.memory_space<vmem>>) attributes {dimension_semantics = [#tpu.dimension_semantics<parallel>, #tpu.dimension_semantics<arbitrary>], iteration_bounds = array<i64: 1, 1>, scalar_prefetch = 0 : i64, scratch_operands = 1 : i64, tpu.core_type = #tpu.core_type<tc>, window_params = [{transform_indices = @transform_0, window_bounds = array<i64: 1, 128>}, {transform_indices = @transform_1, window_bounds = array<i64: 16, 128>}, {transform_indices = @transform_2, window_bounds = array<i64: 128, 1>}, {pipeline_mode = #tpu.pipeline_mode<synchronous>, transform_indices = @transform_3, window_bounds = array<i64: 1, 128>}, {pipeline_mode = #tpu.pipeline_mode<synchronous>, transform_indices = @transform_4, window_bounds = array<i64: 256, 128>}, {transform_indices = @transform_5, window_bounds = array<i64: 16, 128>}]} {
    %c0_i32 = arith.constant 0 : i32
    %0 = arith.cmpi eq, %arg1, %c0_i32 : i32
    %1 = arith.extui %0 : i1 to i32
    %c0_i32_0 = arith.constant 0 : i32
    %2 = arith.cmpi ne, %1, %c0_i32_0 : i32
    scf.if %2 {
      %cst_14 = arith.constant 0.000000e+00 : f32
      %31 = vector.broadcast %cst_14 : f32 to vector<16x128xf32>
      %c0_15 = arith.constant 0 : index
      %c0_16 = arith.constant 0 : index
      %32 = vector.load %arg8[%c0_15, %c0_16] : memref<16x128xf32, #tpu.memory_space<vmem>>, vector<16x128xf32>
      tpu.vector_store %arg8[%c0_15, %c0_16], %31 {strides = array<i32>} : memref<16x128xf32, #tpu.memory_space<vmem>>, vector<16x128xf32>,
    } else {
    }
    %c16_i32 = arith.constant 16 : i32
    %3 = arith.muli %arg0, %c16_i32 : i32
    %4 = tpu.iota {dimensions = array<i32: 0>} : vector<16x128xi32>
    %5 = vector.broadcast %3 : i32 to vector<16x128xi32>
    %6 = arith.addi %5, %4 : vector<16x128xi32>
    %c0 = arith.constant 0 : index
    %c0_1 = arith.constant 0 : index
    %7 = vector.load %arg2[%c0, %c0_1] : memref<1x128xi32, #tpu.memory_space<vmem>>, vector<1x128xi32>
    %8 = vector.broadcast %7 : vector<1x128xi32> to vector<16x128xi32>
    %9 = arith.cmpi eq, %6, %8 : vector<16x128xi32>
    %10 = arith.extui %9 : vector<16x128xi1> to vector<16x128xi32>
    %11 = arith.sitofp %10 : vector<16x128xi32> to vector<16x128xf32>
    %c0_2 = arith.constant 0 : index
    %c0_3 = arith.constant 0 : index
    %12 = vector.load %arg4[%c0_2, %c0_3] : memref<128x1xf32, #tpu.memory_space<vmem>>, vector<128x1xf32>
    %c0_4 = arith.constant 0 : index
    %c0_5 = arith.constant 0 : index
    %13 = vector.load %arg5[%c0_4, %c0_5] : memref<1x128xf32, #tpu.memory_space<vmem>>, vector<1x128xf32>
    %14 = vector.broadcast %12 : vector<128x1xf32> to vector<128x128xf32>
    %15 = vector.broadcast %13 : vector<1x128xf32> to vector<128x128xf32>
    %16 = arith.mulf %14, %15 : vector<128x128xf32>
    %cst = arith.constant 0.000000e+00 : f32
    %17 = vector.broadcast %cst : f32 to vector<128x128xf32>
    %18 = arith.maximumf %16, %17 : vector<128x128xf32>
    %19 = tpu.iota {dimensions = array<i32: 1>} : vector<128x128xi32>
    %c32_i32 = arith.constant 32 : i32
    %20 = vector.broadcast %c32_i32 : i32 to vector<128x128xi32>
    %21 = arith.cmpi eq, %19, %20 : vector<128x128xi32>
    %cst_6 = arith.constant 1.000000e+00 : f32
    %22 = vector.broadcast %cst_6 : f32 to vector<128x128xf32>
    %23 = arith.select %21, %22, %18 : vector<128x128xi1>, vector<128x128xf32>
    %c0_7 = arith.constant 0 : index
    %c0_8 = arith.constant 0 : index
    %24 = vector.load %arg8[%c0_7, %c0_8] : memref<16x128xf32, #tpu.memory_space<vmem>>, vector<16x128xf32>
    %cst_9 = arith.constant dense<0.000000e+00> : vector<16x128xf32>
    %25 = tpu.matmul %11, %23, %cst_9 {dimension_numbers = #tpu.dot_dimension_numbers<[1], [0], [0], [1], [0, 0, 1, 1], [], []>} : vector<16x128xf32>, vector<128x128xf32>, vector<16x128xf32> -> vector<16x128xf32>
    %26 = arith.addf %24, %25 : vector<16x128xf32>
    %c0_10 = arith.constant 0 : index
    %c0_11 = arith.constant 0 : index
    %27 = vector.load %arg8[%c0_10, %c0_11] : memref<16x128xf32, #tpu.memory_space<vmem>>, vector<16x128xf32>
    tpu.vector_store %arg8[%c0_10, %c0_11], %26 {strides = array<i32>} : memref<16x128xf32, #tpu.memory_space<vmem>>, vector<16x128xf32>,
    %c0_i32_12 = arith.constant 0 : i32
    %28 = arith.cmpi eq, %arg1, %c0_i32_12 : i32
    %29 = arith.extui %28 : i1 to i32
    %c0_i32_13 = arith.constant 0 : i32
    %30 = arith.cmpi ne, %29, %c0_i32_13 : i32
    scf.if %30 {
      %c0_14 = arith.constant 0 : index
      %c32 = arith.constant 32 : index
      %31 = vector.load %arg8[%c0_14, %c32] : memref<16x128xf32, #tpu.memory_space<vmem>>, vector<16x1xf32>
      %32 = tpu.iota {dimensions = array<i32: 1>} : vector<16x128xi32>
      %c8_i32 = arith.constant 8 : i32
      %33 = vector.broadcast %c8_i32 : i32 to vector<16x128xi32>
      %34 = arith.cmpi eq, %32, %33 : vector<16x128xi32>
      %c0_15 = arith.constant 0 : index
      %c0_16 = arith.constant 0 : index
      %35 = vector.load %arg3[%c0_15, %c0_16] : memref<16x128xf32, #tpu.memory_space<vmem>>, vector<16x128xf32>
      %cst_17 = arith.constant 1.000000e+00 : f32
      %36 = vector.broadcast %cst_17 : f32 to vector<16x128xf32>
      %37 = vector.shape_cast %31 : vector<16x1xf32> to vector<16x1xf32>
      %38 = vector.broadcast %37 : vector<16x1xf32> to vector<16x128xf32>
      %39 = arith.select %34, %36, %38 : vector<16x128xi1>, vector<16x128xf32>
      %40 = arith.mulf %35, %39 : vector<16x128xf32>
      %c0_18 = arith.constant 0 : index
      %c0_19 = arith.constant 0 : index
      %41 = vector.load %arg8[%c0_18, %c0_19] : memref<16x128xf32, #tpu.memory_space<vmem>>, vector<16x128xf32>
      %42 = tpu.concatenate %40, %41 in 1 : vector<16x128xf32>, vector<16x128xf32> -> vector<16x256xf32>
      %c0_20 = arith.constant 0 : index
      %c0_21 = arith.constant 0 : index
      %43 = vector.load %arg6[%c0_20, %c0_21] : memref<256x128xf32, #tpu.memory_space<vmem>>, vector<256x128xf32>
      %cst_22 = arith.constant dense<0.000000e+00> : vector<16x128xf32>
      %44 = tpu.matmul %42, %43, %cst_22 {dimension_numbers = #tpu.dot_dimension_numbers<[1], [0], [0], [1], [0, 0, 1, 1], [], []>} : vector<16x256xf32>, vector<256x128xf32>, vector<16x128xf32> -> vector<16x128xf32>
      %cst_23 = arith.constant 0.000000e+00 : f32
      %45 = vector.broadcast %cst_23 : f32 to vector<16x128xf32>
      %46 = arith.maximumf %44, %45 : vector<16x128xf32>
      %c0_24 = arith.constant 0 : index
      %c0_25 = arith.constant 0 : index
      %47 = vector.load %arg7[%c0_24, %c0_25] : memref<16x128xf32, #tpu.memory_space<vmem>>, vector<16x128xf32>
      tpu.vector_store %arg7[%c0_24, %c0_25], %46 {strides = array<i32>} : memref<16x128xf32, #tpu.memory_space<vmem>>, vector<16x128xf32>,
    } else {
    }
    return
  }
  func.func @transform_0(%arg0: i32, %arg1: i32) -> (i32, i32) {
    %c0_i32 = arith.constant 0 : i32
    %c0_i32_0 = arith.constant 0 : i32
    return %c0_i32, %arg1 : i32, i32
  }
  func.func @transform_1(%arg0: i32, %arg1: i32) -> (i32, i32) {
    %c0_i32 = arith.constant 0 : i32
    %c0_i32_0 = arith.constant 0 : i32
    return %arg0, %c0_i32 : i32, i32
  }
  func.func @transform_2(%arg0: i32, %arg1: i32) -> (i32, i32) {
    %c0_i32 = arith.constant 0 : i32
    %c0_i32_0 = arith.constant 0 : i32
    return %arg1, %c0_i32 : i32, i32
  }
  func.func @transform_3(%arg0: i32, %arg1: i32) -> (i32, i32) {
    %c0_i32 = arith.constant 0 : i32
    %c0_i32_0 = arith.constant 0 : i32
    %c0_i32_1 = arith.constant 0 : i32
    return %c0_i32, %c0_i32_0 : i32, i32
  }
  func.func @transform_4(%arg0: i32, %arg1: i32) -> (i32, i32) {
    %c0_i32 = arith.constant 0 : i32
    %c0_i32_0 = arith.constant 0 : i32
    %c0_i32_1 = arith.constant 0 : i32
    return %c0_i32, %c0_i32_0 : i32, i32
  }
  func.func @transform_5(%arg0: i32, %arg1: i32) -> (i32, i32) {
    %c0_i32 = arith.constant 0 : i32
    %c0_i32_0 = arith.constant 0 : i32
    return %arg0, %c0_i32 : i32, i32
  }
}

</mosaic_0001>

<llo_original>
// kernel: s2v_forward.1
$region0: #{s2v_forward.1}
  #allocation0 [shape = 'u32[]', space=smem, size = 0x4, offset = 0x4, fixed_abs, tag = 'smem constant byte address 0x4 - core index']
  #allocation1 [shape = 'u32[144,128]{1,0:T(1,128)}', space=vmem, size = 0x12000, scoped, tag = 'internal scratch']
  #allocation2 [shape = 'f32[16,128]{1,0:T(8,128)}', space=vmem, size = 0x2000, scoped, tag = 'scratch operand']
  %s0 = inlined_call_operand.vmem [shape: s32[1,128], index: 0, kind: input, shape index: {}]
  %s1 = inlined_call_operand.vmem [shape: f32[16,128], index: 1, kind: input, shape index: {}]
  %s2 = inlined_call_operand.vmem [shape: f32[128,1], index: 2, kind: input, shape index: {}]
  %s3 = inlined_call_operand.vmem [shape: f32[1,128], index: 3, kind: input, shape index: {}]
  %s4 = inlined_call_operand.vmem [shape: f32[256,128], index: 4, kind: input, shape index: {}]
  %s5 = inlined_call_operand.hbm [shape: f32[16,128], index: 5, kind: output, shape index: {}]
  %s6 = sld [smem:[#allocation0]]
  $region38: #{s2v_forward.1} parent=0
    _
  %s8 = ssub.s32 1, %s6
  %s9 = scalar_select 0, %s8, %s6
  $region1: #{s2v_forward.1} parent=0
    #allocation3 [shape = 'u8[8192]{0}', space=vmem, size = 0x2000, scoped, tag = 'output window, operand 0, single buffered']
    #allocation4 [shape = 's32[1]{0}', space=sflag, size = 0x4, scoped, tag = 'scoped memory for s2v_forward.1']
    %10 = vsyncpa [#allocation4], 0
    // Predicated region
    $region2: #{s2v_forward.1} parent=1 // pred_check
      _
    $region3: #{s2v_forward.1} parent=1 // pred_check_branch
      %12 = sbr.rel (0) target = $region5
    $region4: #{s2v_forward.1} parent=1 // pred_region
      _
    $region5: #{s2v_forward.1} parent=1 // pred_fallthru
      _
    // Predicated region
    $region6: #{s2v_forward.1} parent=1 // pred_check
      _
    $region7: #{s2v_forward.1} parent=1 // pred_check_branch
      %14 = sbr.rel (0) target = $region9
    $region8: #{s2v_forward.1} parent=1 // pred_region
      _
    $region9: #{s2v_forward.1} parent=1 // pred_fallthru
      _
    // Predicated region
    $region10: #{s2v_forward.1} parent=1 // pred_check
      _
    $region11: #{s2v_forward.1} parent=1 // pred_check_branch
      %16 = sbr.rel (0) target = $region13
    $region12: #{s2v_forward.1} parent=1 // pred_region
      _
    $region13: #{s2v_forward.1} parent=1 // pred_fallthru
      _
    // Predicated region
    $region14: #{s2v_forward.1} parent=1 // pred_check
      _
    $region15: #{s2v_forward.1} parent=1 // pred_check_branch
      %18 = sbr.rel (0) target = $region17
    $region16: #{s2v_forward.1} parent=1 // pred_region
      _
    $region17: #{s2v_forward.1} parent=1 // pred_fallthru
      _
    // Predicated region
    $region18: #{s2v_forward.1} parent=1 // pred_check
      _
    $region19: #{s2v_forward.1} parent=1 // pred_check_branch
      %20 = sbr.rel (0) target = $region21
    $region20: #{s2v_forward.1} parent=1 // pred_region
      _
    $region21: #{s2v_forward.1} parent=1 // pred_fallthru
      _
    %p21 = scmp.eq.s32.totalorder 0, 0
    // Predicated region
    $region22: #{s2v_forward.1} parent=1 // pred_check
      %p22 = pneg %p21
    $region23: #{s2v_forward.1} parent=1 // pred_check_branch
      %24 = sbr.rel (%p22) target = $region25
    $region24: #{s2v_forward.1} parent=1 // pred_region
      %25 = vst [vmem:[#allocation2] sm:$0xff] 0.0
      %26 = vst [vmem:[#allocation2 + $0x8] sm:$0xff] 0.0
    $region25: #{s2v_forward.1} parent=1 // pred_fallthru
      _
    %s27 = smul.u32 0, 16
    %v28 = vlaneseq
    %v29 = vshrl.u32 %v28, 7
    %v30 = vadd.s32 %v29, 8
    %v31 = vstv %s27
    %v32 = vadd.s32 %v31, %v29
    %v33 = vadd.s32 %v31, %v30
    %v34 = vld [vmem:[%s0] sm:$0x1]
    %v35 = vlaneseq
    %v36 = vshrl.u32 %v35, 7
    %v37 = vsub.s32 0, %v36
    %v38 = vrot.slane %v34, %v37
    %vm39 = vcmp.eq.s32.totalorder %v32, %v38
    %vm40 = vcmp.eq.s32.totalorder %v33, %v38
    %v41 = vsel %vm39, 1, 0
    %v42 = vsel %vm40, 1, 0
    %v43 = vcvt.s32.f32 %v41
    %v44 = vcvt.s32.f32 %v42
    %v45 = vld [vmem:[%s2] sm:$0xff]
    %v46 = vld [vmem:[%s2 + $0x8] sm:$0xff]
    %v47 = vld [vmem:[%s2 + $0x10] sm:$0xff]
    %v48 = vld [vmem:[%s2 + $0x18] sm:$0xff]
    %v49 = vld [vmem:[%s2 + $0x20] sm:$0xff]
    %v50 = vld [vmem:[%s2 + $0x28] sm:$0xff]
    %v51 = vld [vmem:[%s2 + $0x30] sm:$0xff]
    %v52 = vld [vmem:[%s2 + $0x38] sm:$0xff]
    %v53 = vld [vmem:[%s2 + $0x40] sm:$0xff]
    %v54 = vld [vmem:[%s2 + $0x48] sm:$0xff]
    %v55 = vld [vmem:[%s2 + $0x50] sm:$0xff]
    %v56 = vld [vmem:[%s2 + $0x58] sm:$0xff]
    %v57 = vld [vmem:[%s2 + $0x60] sm:$0xff]
    %v58 = vld [vmem:[%s2 + $0x68] sm:$0xff]
    %v59 = vld [vmem:[%s2 + $0x70] sm:$0xff]
    %v60 = vld [vmem:[%s2 + $0x78] sm:$0xff]
    %v61 = vld [vmem:[%s3] sm:$0x1]
    %63 = vset.pattern.permute.xlu0 0
    %64 = vperm.xlu0 %63, %v45
    %v65 = vpop.permute.xlu0 %64
    %68 = vset.pattern.permute.xlu0 0
    %69 = vperm.xlu0 %68, %v46
    %v70 = vpop.permute.xlu0 %69
    %73 = vset.pattern.permute.xlu0 0
    %74 = vperm.xlu0 %73, %v47
    %v75 = vpop.permute.xlu0 %74
    %78 = vset.pattern.permute.xlu0 0
    %79 = vperm.xlu0 %78, %v48
    %v80 = vpop.permute.xlu0 %79
    %83 = vset.pattern.permute.xlu0 0
    %84 = vperm.xlu0 %83, %v49
    %v85 = vpop.permute.xlu0 %84
    %88 = vset.pattern.permute.xlu0 0
    %89 = vperm.xlu0 %88, %v50
    %v90 = vpop.permute.xlu0 %89
    %93 = vset.pattern.permute.xlu0 0
    %94 = vperm.xlu0 %93, %v51
    %v95 = vpop.permute.xlu0 %94
    %98 = vset.pattern.permute.xlu0 0
    %99 = vperm.xlu0 %98, %v52
    %v100 = vpop.permute.xlu0 %99
    %103 = vset.pattern.permute.xlu0 0
    %104 = vperm.xlu0 %103, %v53
    %v105 = vpop.permute.xlu0 %104
    %108 = vset.pattern.permute.xlu0 0
    %109 = vperm.xlu0 %108, %v54
    %v110 = vpop.permute.xlu0 %109
    %113 = vset.pattern.permute.xlu0 0
    %114 = vperm.xlu0 %113, %v55
    %v115 = vpop.permute.xlu0 %114
    %118 = vset.pattern.permute.xlu0 0
    %119 = vperm.xlu0 %118, %v56
    %v120 = vpop.permute.xlu0 %119
    %123 = vset.pattern.permute.xlu0 0
    %124 = vperm.xlu0 %123, %v57
    %v125 = vpop.permute.xlu0 %124
    %128 = vset.pattern.permute.xlu0 0
    %129 = vperm.xlu0 %128, %v58
    %v130 = vpop.permute.xlu0 %129
    %133 = vset.pattern.permute.xlu0 0
    %134 = vperm.xlu0 %133, %v59
    %v135 = vpop.permute.xlu0 %134
    %138 = vset.pattern.permute.xlu0 0
    %139 = vperm.xlu0 %138, %v60
    %v140 = vpop.permute.xlu0 %139
    %v143 = vlaneseq
    %v144 = vshrl.u32 %v143, 7
    %v145 = vsub.s32 0, %v144
    %v146 = vrot.slane %v61, %v145
    %v148 = vmul.f32 %v65, %v146
    %v149 = vmul.f32 %v70, %v146
    %v150 = vmul.f32 %v75, %v146
    %v151 = vmul.f32 %v80, %v146
    %v152 = vmul.f32 %v85, %v146
    %v153 = vmul.f32 %v90, %v146
    %v154 = vmul.f32 %v95, %v146
    %v155 = vmul.f32 %v100, %v146
    %v156 = vmul.f32 %v105, %v146
    %v157 = vmul.f32 %v110, %v146
    %v158 = vmul.f32 %v115, %v146
    %v159 = vmul.f32 %v120, %v146
    %v160 = vmul.f32 %v125, %v146
    %v161 = vmul.f32 %v130, %v146
    %v162 = vmul.f32 %v135, %v146
    %v163 = vmul.f32 %v140, %v146
    %v164 = vmax.f32 %v148, 0.0
    %v165 = vmax.f32 %v149, 0.0
    %v166 = vmax.f32 %v150, 0.0
    %v167 = vmax.f32 %v151, 0.0
    %v168 = vmax.f32 %v152, 0.0
    %v169 = vmax.f32 %v153, 0.0
    %v170 = vmax.f32 %v154, 0.0
    %v171 = vmax.f32 %v155, 0.0
    %v172 = vmax.f32 %v156, 0.0
    %v173 = vmax.f32 %v157, 0.0
    %v174 = vmax.f32 %v158, 0.0
    %v175 = vmax.f32 %v159, 0.0
    %v176 = vmax.f32 %v160, 0.0
    %v177 = vmax.f32 %v161, 0.0
    %v178 = vmax.f32 %v162, 0.0
    %v179 = vmax.f32 %v163, 0.0
    %v180 = vlaneseq
    %v181 = vand.u32 %v180, 127
    %vm182 = vcmp.eq.s32.totalorder %v181, 32
    %v183 = vsel %vm182, 1.0, %v164
    %v184 = vsel %vm182, 1.0, %v165
    %v185 = vsel %vm182, 1.0, %v166
    %v186 = vsel %vm182, 1.0, %v167
    %v187 = vsel %vm182, 1.0, %v168
    %v188 = vsel %vm182, 1.0, %v169
    %v189 = vsel %vm182, 1.0, %v170
    %v190 = vsel %vm182, 1.0, %v171
    %v191 = vsel %vm182, 1.0, %v172
    %v192 = vsel %vm182, 1.0, %v173
    %v193 = vsel %vm182, 1.0, %v174
    %v194 = vsel %vm182, 1.0, %v175
    %v195 = vsel %vm182, 1.0, %v176
    %v196 = vsel %vm182, 1.0, %v177
    %v197 = vsel %vm182, 1.0, %v178
    %v198 = vsel %vm182, 1.0, %v179
    %v199 = vld [vmem:[#allocation2] sm:$0xff]
    %v200 = vld [vmem:[#allocation2 + $0x8] sm:$0xff]
    %201 = vmatprep.subr.mxu0 0.0
    %202 = vmatpush1.msra.mxu0 %v183
    %203 = vmatprep.subr.mxu0 0.0
    %204 = vmatpush1.msra.mxu0 %v184
    %205 = vmatprep.subr.mxu0 0.0
    %206 = vmatpush1.msra.mxu0 %v185
    %207 = vmatprep.subr.mxu0 0.0
    %208 = vmatpush1.msra.mxu0 %v186
    %209 = vmatprep.subr.mxu0 0.0
    %210 = vmatpush1.msra.mxu0 %v187
    %211 = vmatprep.subr.mxu0 0.0
    %212 = vmatpush1.msra.mxu0 %v188
    %213 = vmatprep.subr.mxu0 0.0
    %214 = vmatpush1.msra.mxu0 %v189
    %215 = vmatprep.subr.mxu0 0.0
    %216 = vmatpush1.msra.mxu0 %v190
    %217 = vmatprep.subr.mxu0 0.0
    %218 = vmatpush1.msra.mxu0 %v191
    %219 = vmatprep.subr.mxu0 0.0
    %220 = vmatpush1.msra.mxu0 %v192
    %221 = vmatprep.subr.mxu0 0.0
    %222 = vmatpush1.msra.mxu0 %v193
    %223 = vmatprep.subr.mxu0 0.0
    %224 = vmatpush1.msra.mxu0 %v194
    %225 = vmatprep.subr.mxu0 0.0
    %226 = vmatpush1.msra.mxu0 %v195
    %227 = vmatprep.subr.mxu0 0.0
    %228 = vmatpush1.msra.mxu0 %v196
    %229 = vmatprep.subr.mxu0 0.0
    %230 = vmatpush1.msra.mxu0 %v197
    %231 = vmatprep.subr.mxu0 0.0
    %232 = vmatpush1.msra.mxu0 %v198
    %233 = vmatprep.subr.mxu0 0.0
    %234 = vmatpush1.msra.mxu0 0.0
    %235 = vmatprep.subr.mxu0 0.0
    %236 = vmatpush1.msra.mxu0 0.0
    %237 = vmatprep.subr.mxu0 0.0
    %238 = vmatpush1.msra.mxu0 0.0
    %239 = vmatprep.subr.mxu0 0.0
    %240 = vmatpush1.msra.mxu0 0.0
    %241 = vmatprep.subr.mxu0 0.0
    %242 = vmatpush1.msra.mxu0 0.0
    %243 = vmatprep.subr.mxu0 0.0
    %244 = vmatpush1.msra.mxu0 0.0
    %245 = vmatprep.subr.mxu0 0.0
    %246 = vmatpush1.msra.mxu0 0.0
    %247 = vmatprep.subr.mxu0 0.0
    %248 = vmatpush1.msra.mxu0 0.0
    %249 = vmatprep.subr.mxu0 0.0
    %250 = vmatpush1.msra.mxu0 0.0
    %251 = vmatprep.subr.mxu0 0.0
    %252 = vmatpush1.msra.mxu0 0.0
    %253 = vmatprep.subr.mxu0 0.0
    %254 = vmatpush1.msra.mxu0 0.0
    %255 = vmatprep.subr.mxu0 0.0
    %256 = vmatpush1.msra.mxu0 0.0
    %257 = vmatprep.subr.mxu0 0.0
    %258 = vmatpush1.msra.mxu0 0.0
    %259 = vmatprep.subr.mxu0 0.0
    %260 = vmatpush1.msra.mxu0 0.0
    %261 = vmatprep.subr.mxu0 0.0
    %262 = vmatpush1.msra.mxu0 0.0
    %263 = vmatprep.subr.mxu0 0.0
    %264 = vmatpush1.msra.mxu0 0.0
    %265 = vmatprep.mubr.f32.mxu0 0.0
    %266 = vmatmul.mubr.f32.gmra.mrb[0].mxu0 %v43
    %v267 = vpop.f32.mrb[0].mxu0
    %v268 = vadd.f32 0.0, %v267
    %v269 = vpop.f32.mrb[0].mxu0
    %270 = vmatprep.mubr.f32.mxu0 0.0
    %271 = vmatmul.mubr.f32.gmra.mrb[0].mxu0 %v44
    %v272 = vpop.f32.mrb[0].mxu0
    %v273 = vadd.f32 0.0, %v272
    %v274 = vpop.f32.mrb[0].mxu0
    %275 = vdwg.mxu0
    %v276 = vadd.f32 %v199, %v268
    %v277 = vadd.f32 %v200, %v273
    %278 = vst [vmem:[#allocation2] sm:$0xff] %v276
    %279 = vst [vmem:[#allocation2 + $0x8] sm:$0xff] %v277
    // Predicated region
    $region26: #{s2v_forward.1} parent=1 // pred_check
      %p280 = pneg %p21
    $region27: #{s2v_forward.1} parent=1 // pred_check_branch
      %282 = sbr.rel (%p280) target = $region29
    $region28: #{s2v_forward.1} parent=1 // pred_region
      %v283 = vld [vmem:[#allocation2] sm:$0xff]
      %v284 = vld [vmem:[#allocation2 + $0x8] sm:$0xff]
      %vm285 = vcmp.eq.s32.totalorder %v181, 8
      %v286 = vld [vmem:[%s1] sm:$0xff]
      %v287 = vld [vmem:[%s1 + $0x8] sm:$0xff]
      %289 = vset.pattern.permute.xlu0 32
      %290 = vperm.xlu0 %289, %v283
      %v291 = vpop.permute.xlu0 %290
      %294 = vset.pattern.permute.xlu0 32
      %295 = vperm.xlu0 %294, %v284
      %v296 = vpop.permute.xlu0 %295
      %v298 = vsel %vm285, 1.0, %v291
      %v299 = vsel %vm285, 1.0, %v296
      %v300 = vmul.f32 %v286, %v298
      %v301 = vmul.f32 %v287, %v299
      %v302 = vld [vmem:[%s4] sm:$0xff]
      %v303 = vld [vmem:[%s4 + $0x8] sm:$0xff]
      %v304 = vld [vmem:[%s4 + $0x10] sm:$0xff]
      %v305 = vld [vmem:[%s4 + $0x18] sm:$0xff]
      %v306 = vld [vmem:[%s4 + $0x20] sm:$0xff]
      %v307 = vld [vmem:[%s4 + $0x28] sm:$0xff]
      %v308 = vld [vmem:[%s4 + $0x30] sm:$0xff]
      %v309 = vld [vmem:[%s4 + $0x38] sm:$0xff]
      %v310 = vld [vmem:[%s4 + $0x40] sm:$0xff]
      %v311 = vld [vmem:[%s4 + $0x48] sm:$0xff]
      %v312 = vld [vmem:[%s4 + $0x50] sm:$0xff]
      %v313 = vld [vmem:[%s4 + $0x58] sm:$0xff]
      %v314 = vld [vmem:[%s4 + $0x60] sm:$0xff]
      %v315 = vld [vmem:[%s4 + $0x68] sm:$0xff]
      %v316 = vld [vmem:[%s4 + $0x70] sm:$0xff]
      %v317 = vld [vmem:[%s4 + $0x78] sm:$0xff]
      %v318 = vld [vmem:[%s4 + $0x80] sm:$0xff]
      %v319 = vld [vmem:[%s4 + $0x88] sm:$0xff]
      %v320 = vld [vmem:[%s4 + $0x90] sm:$0xff]
      %v321 = vld [vmem:[%s4 + $0x98] sm:$0xff]
      %v322 = vld [vmem:[%s4 + $0xa0] sm:$0xff]
      %v323 = vld [vmem:[%s4 + $0xa8] sm:$0xff]
      %v324 = vld [vmem:[%s4 + $0xb0] sm:$0xff]
      %v325 = vld [vmem:[%s4 + $0xb8] sm:$0xff]
      %v326 = vld [vmem:[%s4 + $0xc0] sm:$0xff]
      %v327 = vld [vmem:[%s4 + $0xc8] sm:$0xff]
      %v328 = vld [vmem:[%s4 + $0xd0] sm:$0xff]
      %v329 = vld [vmem:[%s4 + $0xd8] sm:$0xff]
      %v330 = vld [vmem:[%s4 + $0xe0] sm:$0xff]
      %v331 = vld [vmem:[%s4 + $0xe8] sm:$0xff]
      %v332 = vld [vmem:[%s4 + $0xf0] sm:$0xff]
      %v333 = vld [vmem:[%s4 + $0xf8] sm:$0xff]
      %334 = vmatprep.subr.mxu0 0.0
      %335 = vmatpush1.msra.mxu0 %v302
      %336 = vmatprep.subr.mxu0 0.0
      %337 = vmatpush1.msra.mxu0 %v303
      %338 = vmatprep.subr.mxu0 0.0
      %339 = vmatpush1.msra.mxu0 %v304
      %340 = vmatprep.subr.mxu0 0.0
      %341 = vmatpush1.msra.mxu0 %v305
      %342 = vmatprep.subr.mxu0 0.0
      %343 = vmatpush1.msra.mxu0 %v306
      %344 = vmatprep.subr.mxu0 0.0
      %345 = vmatpush1.msra.mxu0 %v307
      %346 = vmatprep.subr.mxu0 0.0
      %347 = vmatpush1.msra.mxu0 %v308
      %348 = vmatprep.subr.mxu0 0.0
      %349 = vmatpush1.msra.mxu0 %v309
      %350 = vmatprep.subr.mxu0 0.0
      %351 = vmatpush1.msra.mxu0 %v310
      %352 = vmatprep.subr.mxu0 0.0
      %353 = vmatpush1.msra.mxu0 %v311
      %354 = vmatprep.subr.mxu0 0.0
      %355 = vmatpush1.msra.mxu0 %v312
      %356 = vmatprep.subr.mxu0 0.0
      %357 = vmatpush1.msra.mxu0 %v313
      %358 = vmatprep.subr.mxu0 0.0
      %359 = vmatpush1.msra.mxu0 %v314
      %360 = vmatprep.subr.mxu0 0.0
      %361 = vmatpush1.msra.mxu0 %v315
      %362 = vmatprep.subr.mxu0 0.0
      %363 = vmatpush1.msra.mxu0 %v316
      %364 = vmatprep.subr.mxu0 0.0
      %365 = vmatpush1.msra.mxu0 %v317
      %366 = vmatprep.subr.mxu0 0.0
      %367 = vmatpush1.msra.mxu0 %v318
      %368 = vmatprep.subr.mxu0 0.0
      %369 = vmatpush1.msra.mxu0 %v319
      %370 = vmatprep.subr.mxu0 0.0
      %371 = vmatpush1.msra.mxu0 %v320
      %372 = vmatprep.subr.mxu0 0.0
      %373 = vmatpush1.msra.mxu0 %v321
      %374 = vmatprep.subr.mxu0 0.0
      %375 = vmatpush1.msra.mxu0 %v322
      %376 = vmatprep.subr.mxu0 0.0
      %377 = vmatpush1.msra.mxu0 %v323
      %378 = vmatprep.subr.mxu0 0.0
      %379 = vmatpush1.msra.mxu0 %v324
      %380 = vmatprep.subr.mxu0 0.0
      %381 = vmatpush1.msra.mxu0 %v325
      %382 = vmatprep.subr.mxu0 0.0
      %383 = vmatpush1.msra.mxu0 %v326
      %384 = vmatprep.subr.mxu0 0.0
      %385 = vmatpush1.msra.mxu0 %v327
      %386 = vmatprep.subr.mxu0 0.0
      %387 = vmatpush1.msra.mxu0 %v328
      %388 = vmatprep.subr.mxu0 0.0
      %389 = vmatpush1.msra.mxu0 %v329
      %390 = vmatprep.subr.mxu0 0.0
      %391 = vmatpush1.msra.mxu0 %v330
      %392 = vmatprep.subr.mxu0 0.0
      %393 = vmatpush1.msra.mxu0 %v331
      %394 = vmatprep.subr.mxu0 0.0
      %395 = vmatpush1.msra.mxu0 %v332
      %396 = vmatprep.subr.mxu0 0.0
      %397 = vmatpush1.msra.mxu0 %v333
      %398 = vmatprep.mubr.f32.mxu0 %v283
      %399 = vmatmul.mubr.f32.gmra.mrb[0].mxu0 %v300
      %v400 = vpop.f32.mrb[0].mxu0
      %v401 = vadd.f32 0.0, %v400
      %v402 = vpop.f32.mrb[0].mxu0
      %403 = vmatprep.mubr.f32.mxu0 %v284
      %404 = vmatmul.mubr.f32.gmra.mrb[0].mxu0 %v301
      %v405 = vpop.f32.mrb[0].mxu0
      %v406 = vadd.f32 0.0, %v405
      %v407 = vpop.f32.mrb[0].mxu0
      %408 = vdwg.mxu0
      %v409 = vmax.f32 %v401, 0.0
      %v410 = vmax.f32 %v406, 0.0
      %411 = vst [vmem:[#allocation3] sm:$0xff] %v409
      %412 = vst [vmem:[#allocation3 + $0x8] sm:$0xff] %v410
    $region29: #{s2v_forward.1} parent=1 // pred_fallthru
      _
    // Predicated region
    $region30: #{s2v_forward.1} parent=1 // pred_check
      _
    $region31: #{s2v_forward.1} parent=1 // pred_check_branch
      %414 = sbr.rel (0) target = $region33
    $region32: #{s2v_forward.1} parent=1 // pred_region
      %s416 = ssub.s32 256, 256
      %417 = vsyncadd [#allocation4], %s416
      %s418 = sshll.u32 [#allocation3], 4
      %s419 = int_to_ptr.vmem [resolvable:$true] %s418
      %424 = dma.vmem_to_hbm [thread:$0]  %s419, 256, %s5, [#allocation4], 128, 128, 8
    $region33: #{s2v_forward.1} parent=1 // pred_fallthru
      _
    // Predicated region
    $region34: #{s2v_forward.1} parent=1 // pred_check
      _
    $region35: #{s2v_forward.1} parent=1 // pred_check_branch
      %426 = sbr.rel (0) target = $region37
    $region36: #{s2v_forward.1} parent=1 // pred_region
      %427 = dma.done [#allocation4], 256
    $region37: #{s2v_forward.1} parent=1 // pred_fallthru
      _
    %428 = vsyncpa [#allocation4], 1

</llo_original>
